<compile_context>
chip_gen: v7x
topology: tpu7x:2x2x1
jax: 0.10.0
libtpu: 0.0.40
codegen_flags: <defaults>
</compile_context>

<pallas_src>
import functools

import jax
import jax.numpy as jnp
from jax import lax
from jax.experimental import pallas as pl
from jax.experimental.pallas import tpu as pltpu


def _round_up(x, m):
    return (x + m - 1) // m * m


# ----------------------------- Pallas kernel -------------------------------


def _make_dws_kernel(stride, th, wo):
    """Builds the fused kernel for static (stride, output-rows-per-tile, output-cols)."""
    s = stride
    # Group the 9 taps by the parity plane ("pp") of the de-interleaved input they read,
    # so each plane is loaded/upcast exactly once (stride=1 has a single plane).
    taps_by_plane = {}
    for ky in range(3):
        for kx in range(3):
            pp = (ky % s) * s + (kx % s)
            taps_by_plane.setdefault(pp, []).append((3 * ky + kx, ky // s, kx // s))

    def kernel(x_ref, wdw_ref, sdw_ref, bdw_ref, wpw_ref, spw_ref, bpw_ref, out_ref):
        # x_ref  : (1, s*s, RP, CP, Cin_p)   act dtype   de-interleaved padded row window
        # wdw_ref: (9, Cin_p)      f32       depthwise 3x3 weights, tap-major (3*ky+kx)
        # sdw/bdw: (1, Cin_p)      f32       folded BN scale / bias (depthwise branch)
        # wpw_ref: (Cin_p, Cout_p) mxu dtype pointwise 1x1 weights
        # spw/bpw: (1, Cout_p)     f32       folded BN scale / bias (pointwise branch)
        # out_ref: (1, th*wo, Cout_p)  f32
        cin_p = wdw_ref.shape[1]

        w_dw = wdw_ref[...]                                   # (9, Cin_p), loaded once
        acc = jnp.zeros((th, wo, cin_p), jnp.float32)
        for pp, taps in taps_by_plane.items():
            plane = x_ref[0, pp].astype(jnp.float32)          # (RP, CP, Cin_p)
            for k, i0, j0 in taps:                            # static unroll (9 taps total)
                acc = acc + plane[i0:i0 + th, j0:j0 + wo, :] * w_dw[k]

        # Folded BN + ReLU (depthwise branch), f32 on the VPU.
        y = jnp.maximum(acc * sdw_ref[0] + bdw_ref[0], 0.0)

        # Pointwise 1x1 conv == channel matmul on the MXU (f32 accumulation).
        y2 = y.reshape(th * wo, cin_p).astype(wpw_ref.dtype)
        z = jnp.dot(y2, wpw_ref[...], preferred_element_type=jnp.float32)

        # Folded BN + ReLU (pointwise branch); output block is lane-dense (Cout_p % 128 == 0).
        out_ref[0] = jnp.maximum(z * spw_ref[0] + bpw_ref[0], 0.0)

    return kernel


# ------------------------------- Wrapper ------------------------------------


def dws_conv_block(x_nchw, params, stride, *, tile_rows=8,
                   act_dtype=jnp.bfloat16, mxu_dtype=jnp.bfloat16):
    """Forward pass of DwsConvBlock. x_nchw: (N, Cin, H, W) float32, NCHW like PyTorch."""
    (w_dw, g1, b1, m1, v1, w_pw, g2, b2, m2, v2) = params
    eps = 1e-5
    s = int(stride)

    n, cin, h, w = x_nchw.shape
    cout = w_pw.shape[0]
    ho = (h + 2 - 3) // s + 1
    wo = (w + 2 - 3) // s + 1

    cin_p = _round_up(cin, 128)      # lane-dense channels (and K >= 128 for the MXU)
    cout_p = _round_up(cout, 128)    # lane-dense output -> unmasked stores

    th = max(1, min(int(tile_rows), ho))          # output rows per spatial tile
    r_tiles = -(-ho // th)
    k_units = (3 + s - 1) // s                    # ceil(3 / stride)
    rp = th + k_units - 1                         # row "units" (of s rows) per tile, incl. halo
    cp_units = wo + k_units - 1                   # col units per tile (W is not tiled)
    u_rows = (r_tiles - 1) * th + rp              # total row units needed
    rows_tot = u_rows * s
    cols_tot = cp_units * s

    # ---- input glue (pure data movement): NCHW -> NHWC, channel pad, spatial pad,
    #      stride de-interleave, overlapping row-window stack (~rp/th duplication only).
    x = jnp.transpose(x_nchw, (0, 2, 3, 1)).astype(jnp.float32)
    x = jnp.pad(x, ((0, 0), (1, rows_tot - h - 1), (1, cols_tot - w - 1),
                    (0, cin_p - cin)))
    x = x.reshape(n, u_rows, s, cp_units, s, cin_p)
    x = jnp.transpose(x, (0, 2, 4, 1, 3, 5)).reshape(n, s * s, u_rows, cp_units, cin_p)
    wins = jnp.stack([x[:, :, r * th:r * th + rp] for r in range(r_tiles)], axis=1)
    wins = wins.reshape(n * r_tiles, s * s, rp, cp_units, cin_p).astype(act_dtype)

    # ---- parameter packing / eval-mode BN folding (padded channels get zero weight/scale/bias).
    wdw = jnp.transpose(w_dw.reshape(cin, 3, 3), (1, 2, 0)).reshape(9, cin)
    wdw = jnp.pad(wdw, ((0, 0), (0, cin_p - cin))).astype(jnp.float32)
    inv1 = g1 / jnp.sqrt(v1 + eps)
    sdw = jnp.pad(inv1, (0, cin_p - cin)).reshape(1, cin_p).astype(jnp.float32)
    bdw = jnp.pad(b1 - m1 * inv1, (0, cin_p - cin)).reshape(1, cin_p).astype(jnp.float32)

    wpw = jnp.transpose(w_pw.reshape(cout, cin), (1, 0))       # (Cin, Cout)
    wpw = jnp.pad(wpw, ((0, cin_p - cin), (0, cout_p - cout))).astype(mxu_dtype)
    inv2 = g2 / jnp.sqrt(v2 + eps)
    spw = jnp.pad(inv2, (0, cout_p - cout)).reshape(1, cout_p).astype(jnp.float32)
    bpw = jnp.pad(b2 - m2 * inv2, (0, cout_p - cout)).reshape(1, cout_p).astype(jnp.float32)

    n_tiles = n * r_tiles
    kernel = _make_dws_kernel(s, th, wo)

    flops = 2 * n_tiles * th * wo * cin_p * (9 + cout_p)
    bytes_accessed = (wins.size * wins.dtype.itemsize
                      + n_tiles * th * wo * cout_p * 4
                      + wdw.size * 4 + wpw.size * wpw.dtype.itemsize
                      + 2 * (cin_p + cout_p) * 4)

    out = pl.pallas_call(
        kernel,
        out_shape=jax.ShapeDtypeStruct((n_tiles, th * wo, cout_p), jnp.float32),
        grid_spec=pltpu.PrefetchScalarGridSpec(
            num_scalar_prefetch=0,
            grid=(n_tiles,),
            in_specs=[
                pl.BlockSpec((1, s * s, rp, cp_units, cin_p),
                             lambda i: (i, 0, 0, 0, 0)),
                pl.BlockSpec((9, cin_p), lambda i: (0, 0)),
                pl.BlockSpec((1, cin_p), lambda i: (0, 0)),
                pl.BlockSpec((1, cin_p), lambda i: (0, 0)),
                pl.BlockSpec((cin_p, cout_p), lambda i: (0, 0)),
                pl.BlockSpec((1, cout_p), lambda i: (0, 0)),
                pl.BlockSpec((1, cout_p), lambda i: (0, 0)),
            ],
            out_specs=pl.BlockSpec((1, th * wo, cout_p), lambda i: (i, 0, 0)),
        ),
        compiler_params=pltpu.CompilerParams(
            dimension_semantics=("parallel",),
            vmem_limit_bytes=32 * 1024 * 1024),
        cost_estimate=pl.CostEstimate(flops=int(flops), transcendentals=0,
                                      bytes_accessed=int(bytes_accessed)),
    )(wins, wdw, sdw, bdw, wpw, spw, bpw)

    # (N*R, TH*Wo, Cout_p) -> NCHW, dropping row-tile and channel padding.
    out = out.reshape(n, r_tiles * th, wo, cout_p)[:, :ho, :, :cout]
    return jnp.transpose(out, (0, 3, 1, 2))


# ------------------------- Pure-JAX reference -------------------------------


def dws_conv_block_ref(x_nchw, params, stride):
    (w_dw, g1, b1, m1, v1, w_pw, g2, b2, m2, v2) = params
    eps = 1e-5
    cin = x_nchw.shape[1]

    y = lax.conv_general_dilated(
        x_nchw, w_dw, window_strides=(stride, stride),
        padding=((1, 1), (1, 1)),
        dimension_numbers=("NCHW", "OIHW", "NCHW"),
        feature_group_count=cin)
    y = (y - m1[None, :, None, None]) / jnp.sqrt(v1[None, :, None, None] + eps)
    y = y * g1[None, :, None, None] + b1[None, :, None, None]
    y = jnp.maximum(y, 0.0)

    z = lax.conv_general_dilated(
        y, w_pw, window_strides=(1, 1), padding=((0, 0), (0, 0)),
        dimension_numbers=("NCHW", "OIHW", "NCHW"))
    z = (z - m2[None, :, None, None]) / jnp.sqrt(v2[None, :, None, None] + eps)
    z = z * g2[None, :, None, None] + b2[None, :, None, None]
    return jnp.maximum(z, 0.0)


# --------------------------------- Main --------------------------------------


if __name__ == "__main__":
    N, CIN, COUT, H, W = 2, 4, 8, 16, 16

    key = jax.random.PRNGKey(0)
    keys = jax.random.split(key, 11)

    x = jax.random.normal(keys[0], (N, CIN, H, W), dtype=jnp.float32)

    # Deterministic synthetic parameters (not a checkpoint load).
    w_dw = jax.random.normal(keys[1], (CIN, 1, 3, 3), jnp.float32) * 0.3
    g1 = 1.0 + 0.1 * jax.random.normal(keys[2], (CIN,), jnp.float32)
    b1 = 0.1 * jax.random.normal(keys[3], (CIN,), jnp.float32)
    m1 = 0.1 * jax.random.normal(keys[4], (CIN,), jnp.float32)
    v1 = 1.0 + 0.1 * jax.nn.sigmoid(jax.random.normal(keys[5], (CIN,), jnp.float32))

    w_pw = jax.random.normal(keys[6], (COUT, CIN, 1, 1), jnp.float32) * 0.3
    g2 = 1.0 + 0.1 * jax.random.normal(keys[7], (COUT,), jnp.float32)
    b2 = 0.1 * jax.random.normal(keys[8], (COUT,), jnp.float32)
    m2 = 0.1 * jax.random.normal(keys[9], (COUT,), jnp.float32)
    v2 = 1.0 + 0.1 * jax.nn.sigmoid(jax.random.normal(keys[10], (COUT,), jnp.float32))

    params = (w_dw, g1, b1, m1, v1, w_pw, g2, b2, m2, v2)

    # (act dtype, mxu dtype, tile_rows, tolerance).  bf16 storage + bf16 MXU is the fast
    # path (tol relaxed accordingly); the f32 path validates exact numerics + tiling.
    configs = [
        (jnp.bfloat16, jnp.bfloat16, 4, 5e-2),
        (jnp.float32, jnp.float32, 8, 1e-4),
    ]

    ok = True
    for stride in (1, 2):
        ref = dws_conv_block_ref(x, params, stride)
        for act_dtype, mxu_dtype, tile_rows, tol in configs:
            run = jax.jit(functools.partial(
                dws_conv_block, stride=stride, tile_rows=tile_rows,
                act_dtype=act_dtype, mxu_dtype=mxu_dtype))
            out = jax.block_until_ready(run(x, params))
            if out.shape != ref.shape or not jnp.allclose(out, ref, atol=tol, rtol=tol):
                ok = False
                err = (jnp.max(jnp.abs(out - ref))
                       if out.shape == ref.shape else float("nan"))
                print(f"MISMATCH stride={stride} tile_rows={tile_rows} "
                      f"act={jnp.dtype(act_dtype).name} mxu={jnp.dtype(mxu_dtype).name} "
                      f"max_abs_err={err}")

    if ok:
        print("KERNEL_OK")
</pallas_src>

<mosaic_0001>
module attributes {stable_mosaic.version = 11 : i64} {
  func.func @kernel(%arg0: i32, %arg1: memref<1x1x6x18x128xbf16, #tpu.memory_space<vmem>>, %arg2: memref<9x128xf32, #tpu.memory_space<vmem>>, %arg3: memref<1x128xf32, #tpu.memory_space<vmem>>, %arg4: memref<1x128xf32, #tpu.memory_space<vmem>>, %arg5: memref<128x128xbf16, #tpu.memory_space<vmem>>, %arg6: memref<1x128xf32, #tpu.memory_space<vmem>>, %arg7: memref<1x128xf32, #tpu.memory_space<vmem>>, %arg8: memref<1x64x128xf32, #tpu.memory_space<vmem>>) attributes {dimension_semantics = [#tpu.dimension_semantics<parallel>], iteration_bounds = array<i64: 8>, scalar_prefetch = 0 : i64, scratch_operands = 0 : i64, tpu.core_type = #tpu.core_type<tc>, window_params = [{transform_indices = @transform_0, window_bounds = array<i64: 1, 1, 6, 18, 128>}, {pipeline_mode = #tpu.pipeline_mode<synchronous>, transform_indices = @transform_1, window_bounds = array<i64: 9, 128>}, {pipeline_mode = #tpu.pipeline_mode<synchronous>, transform_indices = @transform_2, window_bounds = array<i64: 1, 128>}, {pipeline_mode = #tpu.pipeline_mode<synchronous>, transform_indices = @transform_3, window_bounds = array<i64: 1, 128>}, {pipeline_mode = #tpu.pipeline_mode<synchronous>, transform_indices = @transform_4, window_bounds = array<i64: 128, 128>}, {pipeline_mode = #tpu.pipeline_mode<synchronous>, transform_indices = @transform_5, window_bounds = array<i64: 1, 128>}, {pipeline_mode = #tpu.pipeline_mode<synchronous>, transform_indices = @transform_6, window_bounds = array<i64: 1, 128>}, {transform_indices = @transform_7, window_bounds = array<i64: 1, 64, 128>}]} {
    %c0 = arith.constant 0 : index
    %c0_0 = arith.constant 0 : index
    %0 = vector.load %arg2[%c0, %c0_0] : memref<9x128xf32, #tpu.memory_space<vmem>>, vector<9x128xf32>
    %cst = arith.constant 0.000000e+00 : f32
    %1 = vector.broadcast %cst : f32 to vector<4x16x128xf32>
    %c0_1 = arith.constant 0 : index
    %c0_2 = arith.constant 0 : index
    %c0_3 = arith.constant 0 : index
    %c0_4 = arith.constant 0 : index
    %c0_5 = arith.constant 0 : index
    %2 = vector.load %arg1[%c0_1, %c0_2, %c0_3, %c0_4, %c0_5] : memref<1x1x6x18x128xbf16, #tpu.memory_space<vmem>>, vector<1x1x6x18x128xbf16>
    %3 = vector.shape_cast %2 : vector<1x1x6x18x128xbf16> to vector<6x18x128xbf16>
    %4 = arith.extf %3 : vector<6x18x128xbf16> to vector<6x18x128xf32>
    %5 = vector.extract_strided_slice %4 {offsets = [0, 0, 0], sizes = [4, 16, 128], strides = [1, 1, 1]} : vector<6x18x128xf32> to vector<4x16x128xf32>
    %6 = vector.extract_strided_slice %0 {offsets = [0, 0], sizes = [1, 128], strides = [1, 1]} : vector<9x128xf32> to vector<1x128xf32>
    %7 = vector.shape_cast %6 : vector<1x128xf32> to vector<128xf32>
    %8 = vector.shape_cast %7 : vector<128xf32> to vector<1x1x128xf32>
    %9 = vector.broadcast %8 : vector<1x1x128xf32> to vector<4x16x128xf32>
    %10 = arith.mulf %5, %9 : vector<4x16x128xf32>
    %11 = arith.addf %1, %10 : vector<4x16x128xf32>
    %12 = vector.extract_strided_slice %4 {offsets = [0, 1, 0], sizes = [4, 16, 128], strides = [1, 1, 1]} : vector<6x18x128xf32> to vector<4x16x128xf32>
    %13 = vector.extract_strided_slice %0 {offsets = [1, 0], sizes = [1, 128], strides = [1, 1]} : vector<9x128xf32> to vector<1x128xf32>
    %14 = vector.shape_cast %13 : vector<1x128xf32> to vector<128xf32>
    %15 = vector.shape_cast %14 : vector<128xf32> to vector<1x1x128xf32>
    %16 = vector.broadcast %15 : vector<1x1x128xf32> to vector<4x16x128xf32>
    %17 = arith.mulf %12, %16 : vector<4x16x128xf32>
    %18 = arith.addf %11, %17 : vector<4x16x128xf32>
    %19 = vector.extract_strided_slice %4 {offsets = [0, 2, 0], sizes = [4, 16, 128], strides = [1, 1, 1]} : vector<6x18x128xf32> to vector<4x16x128xf32>
    %20 = vector.extract_strided_slice %0 {offsets = [2, 0], sizes = [1, 128], strides = [1, 1]} : vector<9x128xf32> to vector<1x128xf32>
    %21 = vector.shape_cast %20 : vector<1x128xf32> to vector<128xf32>
    %22 = vector.shape_cast %21 : vector<128xf32> to vector<1x1x128xf32>
    %23 = vector.broadcast %22 : vector<1x1x128xf32> to vector<4x16x128xf32>
    %24 = arith.mulf %19, %23 : vector<4x16x128xf32>
    %25 = arith.addf %18, %24 : vector<4x16x128xf32>
    %26 = vector.extract_strided_slice %4 {offsets = [1, 0, 0], sizes = [4, 16, 128], strides = [1, 1, 1]} : vector<6x18x128xf32> to vector<4x16x128xf32>
    %27 = vector.extract_strided_slice %0 {offsets = [3, 0], sizes = [1, 128], strides = [1, 1]} : vector<9x128xf32> to vector<1x128xf32>
    %28 = vector.shape_cast %27 : vector<1x128xf32> to vector<128xf32>
    %29 = vector.shape_cast %28 : vector<128xf32> to vector<1x1x128xf32>
    %30 = vector.broadcast %29 : vector<1x1x128xf32> to vector<4x16x128xf32>
    %31 = arith.mulf %26, %30 : vector<4x16x128xf32>
    %32 = arith.addf %25, %31 : vector<4x16x128xf32>
    %33 = vector.extract_strided_slice %4 {offsets = [1, 1, 0], sizes = [4, 16, 128], strides = [1, 1, 1]} : vector<6x18x128xf32> to vector<4x16x128xf32>
    %34 = vector.extract_strided_slice %0 {offsets = [4, 0], sizes = [1, 128], strides = [1, 1]} : vector<9x128xf32> to vector<1x128xf32>
    %35 = vector.shape_cast %34 : vector<1x128xf32> to vector<128xf32>
    %36 = vector.shape_cast %35 : vector<128xf32> to vector<1x1x128xf32>
    %37 = vector.broadcast %36 : vector<1x1x128xf32> to vector<4x16x128xf32>
    %38 = arith.mulf %33, %37 : vector<4x16x128xf32>
    %39 = arith.addf %32, %38 : vector<4x16x128xf32>
    %40 = vector.extract_strided_slice %4 {offsets = [1, 2, 0], sizes = [4, 16, 128], strides = [1, 1, 1]} : vector<6x18x128xf32> to vector<4x16x128xf32>
    %41 = vector.extract_strided_slice %0 {offsets = [5, 0], sizes = [1, 128], strides = [1, 1]} : vector<9x128xf32> to vector<1x128xf32>
    %42 = vector.shape_cast %41 : vector<1x128xf32> to vector<128xf32>
    %43 = vector.shape_cast %42 : vector<128xf32> to vector<1x1x128xf32>
    %44 = vector.broadcast %43 : vector<1x1x128xf32> to vector<4x16x128xf32>
    %45 = arith.mulf %40, %44 : vector<4x16x128xf32>
    %46 = arith.addf %39, %45 : vector<4x16x128xf32>
    %47 = vector.extract_strided_slice %4 {offsets = [2, 0, 0], sizes = [4, 16, 128], strides = [1, 1, 1]} : vector<6x18x128xf32> to vector<4x16x128xf32>
    %48 = vector.extract_strided_slice %0 {offsets = [6, 0], sizes = [1, 128], strides = [1, 1]} : vector<9x128xf32> to vector<1x128xf32>
    %49 = vector.shape_cast %48 : vector<1x128xf32> to vector<128xf32>
    %50 = vector.shape_cast %49 : vector<128xf32> to vector<1x1x128xf32>
    %51 = vector.broadcast %50 : vector<1x1x128xf32> to vector<4x16x128xf32>
    %52 = arith.mulf %47, %51 : vector<4x16x128xf32>
    %53 = arith.addf %46, %52 : vector<4x16x128xf32>
    %54 = vector.extract_strided_slice %4 {offsets = [2, 1, 0], sizes = [4, 16, 128], strides = [1, 1, 1]} : vector<6x18x128xf32> to vector<4x16x128xf32>
    %55 = vector.extract_strided_slice %0 {offsets = [7, 0], sizes = [1, 128], strides = [1, 1]} : vector<9x128xf32> to vector<1x128xf32>
    %56 = vector.shape_cast %55 : vector<1x128xf32> to vector<128xf32>
    %57 = vector.shape_cast %56 : vector<128xf32> to vector<1x1x128xf32>
    %58 = vector.broadcast %57 : vector<1x1x128xf32> to vector<4x16x128xf32>
    %59 = arith.mulf %54, %58 : vector<4x16x128xf32>
    %60 = arith.addf %53, %59 : vector<4x16x128xf32>
    %61 = vector.extract_strided_slice %4 {offsets = [2, 2, 0], sizes = [4, 16, 128], strides = [1, 1, 1]} : vector<6x18x128xf32> to vector<4x16x128xf32>
    %62 = vector.extract_strided_slice %0 {offsets = [8, 0], sizes = [1, 128], strides = [1, 1]} : vector<9x128xf32> to vector<1x128xf32>
    %63 = vector.shape_cast %62 : vector<1x128xf32> to vector<128xf32>
    %64 = vector.shape_cast %63 : vector<128xf32> to vector<1x1x128xf32>
    %65 = vector.broadcast %64 : vector<1x1x128xf32> to vector<4x16x128xf32>
    %66 = arith.mulf %61, %65 : vector<4x16x128xf32>
    %67 = arith.addf %60, %66 : vector<4x16x128xf32>
    %c0_6 = arith.constant 0 : index
    %c0_7 = arith.constant 0 : index
    %68 = vector.load %arg3[%c0_6, %c0_7] : memref<1x128xf32, #tpu.memory_space<vmem>>, vector<1x128xf32>
    %69 = vector.shape_cast %68 : vector<1x128xf32> to vector<128xf32>
    %70 = vector.shape_cast %69 : vector<128xf32> to vector<1x1x128xf32>
    %71 = vector.broadcast %70 : vector<1x1x128xf32> to vector<4x16x128xf32>
    %72 = arith.mulf %67, %71 : vector<4x16x128xf32>
    %c0_8 = arith.constant 0 : index
    %c0_9 = arith.constant 0 : index
    %73 = vector.load %arg4[%c0_8, %c0_9] : memref<1x128xf32, #tpu.memory_space<vmem>>, vector<1x128xf32>
    %74 = vector.shape_cast %73 : vector<1x128xf32> to vector<128xf32>
    %75 = vector.shape_cast %74 : vector<128xf32> to vector<1x1x128xf32>
    %76 = vector.broadcast %75 : vector<1x1x128xf32> to vector<4x16x128xf32>
    %77 = arith.addf %72, %76 : vector<4x16x128xf32>
    %cst_10 = arith.constant 0.000000e+00 : f32
    %78 = vector.broadcast %cst_10 : f32 to vector<4x16x128xf32>
    %79 = arith.maximumf %77, %78 : vector<4x16x128xf32>
    %80 = vector.shape_cast %79 : vector<4x16x128xf32> to vector<64x128xf32>
    %81 = arith.truncf %80 : vector<64x128xf32> to vector<64x128xbf16>
    %c0_11 = arith.constant 0 : index
    %c0_12 = arith.constant 0 : index
    %82 = vector.load %arg5[%c0_11, %c0_12] : memref<128x128xbf16, #tpu.memory_space<vmem>>, vector<128x128xbf16>
    %cst_13 = arith.constant dense<0.000000e+00> : vector<64x128xf32>
    %83 = tpu.matmul %81, %82, %cst_13 {dimension_numbers = #tpu.dot_dimension_numbers<[1], [0], [0], [1], [0, 0, 1, 1], [], []>} : vector<64x128xbf16>, vector<128x128xbf16>, vector<64x128xf32> -> vector<64x128xf32>
    %c0_14 = arith.constant 0 : index
    %c0_15 = arith.constant 0 : index
    %84 = vector.load %arg6[%c0_14, %c0_15] : memref<1x128xf32, #tpu.memory_space<vmem>>, vector<1x128xf32>
    %85 = vector.shape_cast %84 : vector<1x128xf32> to vector<128xf32>
    %86 = vector.shape_cast %85 : vector<128xf32> to vector<1x128xf32>
    %87 = vector.broadcast %86 : vector<1x128xf32> to vector<64x128xf32>
    %88 = arith.mulf %83, %87 : vector<64x128xf32>
    %c0_16 = arith.constant 0 : index
    %c0_17 = arith.constant 0 : index
    %89 = vector.load %arg7[%c0_16, %c0_17] : memref<1x128xf32, #tpu.memory_space<vmem>>, vector<1x128xf32>
    %90 = vector.shape_cast %89 : vector<1x128xf32> to vector<128xf32>
    %91 = vector.shape_cast %90 : vector<128xf32> to vector<1x128xf32>
    %92 = vector.broadcast %91 : vector<1x128xf32> to vector<64x128xf32>
    %93 = arith.addf %88, %92 : vector<64x128xf32>
    %cst_18 = arith.constant 0.000000e+00 : f32
    %94 = vector.broadcast %cst_18 : f32 to vector<64x128xf32>
    %95 = arith.maximumf %93, %94 : vector<64x128xf32>
    %c0_19 = arith.constant 0 : index
    %c0_20 = arith.constant 0 : index
    %c0_21 = arith.constant 0 : index
    %96 = vector.load %arg8[%c0_19, %c0_20, %c0_21] : memref<1x64x128xf32, #tpu.memory_space<vmem>>, vector<1x64x128xf32>
    %97 = vector.shape_cast %96 : vector<1x64x128xf32> to vector<64x128xf32>
    %98 = vector.shape_cast %95 : vector<64x128xf32> to vector<1x64x128xf32>
    tpu.vector_store %arg8[%c0_19, %c0_20, %c0_21], %98 {strides = array<i32>} : memref<1x64x128xf32, #tpu.memory_space<vmem>>, vector<1x64x128xf32>,
    return
  }
  func.func @transform_0(%arg0: i32) -> (i32, i32, i32, i32, i32) {
    %c0_i32 = arith.constant 0 : i32
    %c0_i32_0 = arith.constant 0 : i32
    %c0_i32_1 = arith.constant 0 : i32
    %c0_i32_2 = arith.constant 0 : i32
    %c0_i32_3 = arith.constant 0 : i32
    return %arg0, %c0_i32, %c0_i32_0, %c0_i32_1, %c0_i32_2 : i32, i32, i32, i32, i32
  }
  func.func @transform_1(%arg0: i32) -> (i32, i32) {
    %c0_i32 = arith.constant 0 : i32
    %c0_i32_0 = arith.constant 0 : i32
    %c0_i32_1 = arith.constant 0 : i32
    return %c0_i32, %c0_i32_0 : i32, i32
  }
  func.func @transform_2(%arg0: i32) -> (i32, i32) {
    %c0_i32 = arith.constant 0 : i32
    %c0_i32_0 = arith.constant 0 : i32
    %c0_i32_1 = arith.constant 0 : i32
    return %c0_i32, %c0_i32_0 : i32, i32
  }
  func.func @transform_3(%arg0: i32) -> (i32, i32) {
    %c0_i32 = arith.constant 0 : i32
    %c0_i32_0 = arith.constant 0 : i32
    %c0_i32_1 = arith.constant 0 : i32
    return %c0_i32, %c0_i32_0 : i32, i32
  }
  func.func @transform_4(%arg0: i32) -> (i32, i32) {
    %c0_i32 = arith.constant 0 : i32
    %c0_i32_0 = arith.constant 0 : i32
    %c0_i32_1 = arith.constant 0 : i32
    return %c0_i32, %c0_i32_0 : i32, i32
  }
  func.func @transform_5(%arg0: i32) -> (i32, i32) {
    %c0_i32 = arith.constant 0 : i32
    %c0_i32_0 = arith.constant 0 : i32
    %c0_i32_1 = arith.constant 0 : i32
    return %c0_i32, %c0_i32_0 : i32, i32
  }
  func.func @transform_6(%arg0: i32) -> (i32, i32) {
    %c0_i32 = arith.constant 0 : i32
    %c0_i32_0 = arith.constant 0 : i32
    %c0_i32_1 = arith.constant 0 : i32
    return %c0_i32, %c0_i32_0 : i32, i32
  }
  func.func @transform_7(%arg0: i32) -> (i32, i32, i32) {
    %c0_i32 = arith.constant 0 : i32
    %c0_i32_0 = arith.constant 0 : i32
    %c0_i32_1 = arith.constant 0 : i32
    return %arg0, %c0_i32, %c0_i32_0 : i32, i32, i32
  }
}

</mosaic_0001>

<llo_original>
// kernel: dws_conv_block.1
$region0: #{dws_conv_block.1}
  #allocation0 [shape = 'u32[]', space=smem, size = 0x4, offset = 0x4, fixed_abs, tag = 'smem constant byte address 0x4 - core index']
  #allocation1 [shape = 'u32[144,128]{1,0:T(1,128)}', space=vmem, size = 0x12000, scoped, tag = 'internal scratch']
  %s0 = inlined_call_operand.vmem [shape: bf16[8,1,6,18,128], index: 0, kind: input, shape index: {}]
  %s1 = inlined_call_operand.vmem [shape: f32[9,128], index: 1, kind: input, shape index: {}]
  %s2 = inlined_call_operand.vmem [shape: f32[1,128], index: 2, kind: input, shape index: {}]
  %s3 = inlined_call_operand.vmem [shape: f32[1,128], index: 3, kind: input, shape index: {}]
  %s4 = inlined_call_operand.vmem [shape: bf16[128,128], index: 4, kind: input, shape index: {}]
  %s5 = inlined_call_operand.vmem [shape: f32[1,128], index: 5, kind: input, shape index: {}]
  %s6 = inlined_call_operand.vmem [shape: f32[1,128], index: 6, kind: input, shape index: {}]
  %s7 = inlined_call_operand.vmem [shape: f32[8,64,128], index: 7, kind: output, shape index: {}]
  %s8 = sld [smem:[#allocation0]]
  $region61: #{dws_conv_block.1} parent=0
    _
  %s10 = ssub.s32 1, %s8
  %s11 = scalar_select 0, %s10, %s8
  loop: start=0, step=1, limit=10
  $region2: #{dws_conv_block.1} parent=0 // loop_pre_header
    _
  $region3: #{dws_conv_block.1} parent=0 // loop_header
    %s13 = sphi 0, %s17
    %p14 = scmp.ge.s32.totalorder %s13, 10
    %s23 = sphi 0, %s25
    %s26 = sphi 0, %s23
    %s27 = sphi 0, %s26
    %s43 = sphi 0, %s27
    %s47 = sphi 0, %s47
    %s49 = sphi 0, %s47
    %s50 = sphi 0, %s49
    %s64 = sphi 0, %s50
    %s68 = sphi 0, %s68
    %s70 = sphi 0, %s68
    %s71 = sphi 0, %s70
    %s85 = sphi 0, %s71
    %s89 = sphi 0, %s89
    %s91 = sphi 0, %s89
    %s92 = sphi 0, %s91
    %s106 = sphi 0, %s92
    %s110 = sphi 0, %s110
    %s112 = sphi 0, %s110
    %s113 = sphi 0, %s112
    %s127 = sphi 0, %s113
    %s131 = sphi 0, %s131
    %s133 = sphi 0, %s131
    %s134 = sphi 0, %s133
    %s148 = sphi 0, %s134
    %s152 = sphi 0, %s152
    %s154 = sphi 0, %s152
    %s155 = sphi 0, %s154
    %s169 = sphi 0, %s155
    %s175 = sphi 0, %s177
    %s178 = sphi 0, %s175
    %s179 = sphi 0, %s178
    %s195 = sphi 0, %s179
  $region4: #{dws_conv_block.1} parent=0 // loop_header_branch
    %16 = sbr.rel (%p14) target = $region8
  $region5: #{dws_conv_block.1} parent=0 // loop_body
    %s18 = ssub.s32 %s13, 1
    %s19 = ssub.s32 %s13, 2
    %s20 = sadd.s32 %s13, 1
    %s21 = ssub.s32 %s13, %s20
    %p22 = scmp.eq.s32.totalorder %s21, 0
    %s24 = sadd.s32 %s23, 1
    %s25 = scalar_select %p22, %s23, %s24
    %p28 = pneg %p22
    %p29 = scmp.eq.s32.totalorder %s13, 7
    %p30 = por %p28, %p29
    %p31 = scmp.ne.s32.totalorder %s23, %s26
    %p32 = scmp.eq.s32.totalorder %s13, 0
    %p33 = por %p31, %p32
    %p34 = scmp.ne.s32.totalorder %s23, %s26
    %p35 = scmp.eq.s32.totalorder %s18, 7
    %p36 = por %p34, %p35
    %p37 = scmp.ne.s32.totalorder %s26, %s27
    %p38 = scmp.eq.s32.totalorder %s18, 0
    %p39 = por %p37, %p38
    %p40 = scmp.ne.s32.totalorder %s26, %s27
    %p41 = scmp.eq.s32.totalorder %s19, 7
    %p42 = por %p40, %p41
    %p44 = scmp.ne.s32.totalorder %s27, %s43
    %p45 = scmp.eq.s32.totalorder %s19, 0
    %p46 = por %p44, %p45
    %s48 = sadd.s32 %s47, 1
    %p51 = scmp.eq.s32.totalorder %s13, 7
    %p52 = scmp.ne.s32.totalorder %s47, %s49
    %p53 = scmp.eq.s32.totalorder %s13, 0
    %p54 = por %p52, %p53
    %p55 = scmp.ne.s32.totalorder %s47, %s49
    %p56 = scmp.eq.s32.totalorder %s18, 7
    %p57 = por %p55, %p56
    %p58 = scmp.ne.s32.totalorder %s49, %s50
    %p59 = scmp.eq.s32.totalorder %s18, 0
    %p60 = por %p58, %p59
    %p61 = scmp.ne.s32.totalorder %s49, %s50
    %p62 = scmp.eq.s32.totalorder %s19, 7
    %p63 = por %p61, %p62
    %p65 = scmp.ne.s32.totalorder %s50, %s64
    %p66 = scmp.eq.s32.totalorder %s19, 0
    %p67 = por %p65, %p66
    %s69 = sadd.s32 %s68, 1
    %p72 = scmp.eq.s32.totalorder %s13, 7
    %p73 = scmp.ne.s32.totalorder %s68, %s70
    %p74 = scmp.eq.s32.totalorder %s13, 0
    %p75 = por %p73, %p74
    %p76 = scmp.ne.s32.totalorder %s68, %s70
    %p77 = scmp.eq.s32.totalorder %s18, 7
    %p78 = por %p76, %p77
    %p79 = scmp.ne.s32.totalorder %s70, %s71
    %p80 = scmp.eq.s32.totalorder %s18, 0
    %p81 = por %p79, %p80
    %p82 = scmp.ne.s32.totalorder %s70, %s71
    %p83 = scmp.eq.s32.totalorder %s19, 7
    %p84 = por %p82, %p83
    %p86 = scmp.ne.s32.totalorder %s71, %s85
    %p87 = scmp.eq.s32.totalorder %s19, 0
    %p88 = por %p86, %p87
    %s90 = sadd.s32 %s89, 1
    %p93 = scmp.eq.s32.totalorder %s13, 7
    %p94 = scmp.ne.s32.totalorder %s89, %s91
    %p95 = scmp.eq.s32.totalorder %s13, 0
    %p96 = por %p94, %p95
    %p97 = scmp.ne.s32.totalorder %s89, %s91
    %p98 = scmp.eq.s32.totalorder %s18, 7
    %p99 = por %p97, %p98
    %p100 = scmp.ne.s32.totalorder %s91, %s92
    %p101 = scmp.eq.s32.totalorder %s18, 0
    %p102 = por %p100, %p101
    %p103 = scmp.ne.s32.totalorder %s91, %s92
    %p104 = scmp.eq.s32.totalorder %s19, 7
    %p105 = por %p103, %p104
    %p107 = scmp.ne.s32.totalorder %s92, %s106
    %p108 = scmp.eq.s32.totalorder %s19, 0
    %p109 = por %p107, %p108
    %s111 = sadd.s32 %s110, 1
    %p114 = scmp.eq.s32.totalorder %s13, 7
    %p115 = scmp.ne.s32.totalorder %s110, %s112
    %p116 = scmp.eq.s32.totalorder %s13, 0
    %p117 = por %p115, %p116
    %p118 = scmp.ne.s32.totalorder %s110, %s112
    %p119 = scmp.eq.s32.totalorder %s18, 7
    %p120 = por %p118, %p119
    %p121 = scmp.ne.s32.totalorder %s112, %s113
    %p122 = scmp.eq.s32.totalorder %s18, 0
    %p123 = por %p121, %p122
    %p124 = scmp.ne.s32.totalorder %s112, %s113
    %p125 = scmp.eq.s32.totalorder %s19, 7
    %p126 = por %p124, %p125
    %p128 = scmp.ne.s32.totalorder %s113, %s127
    %p129 = scmp.eq.s32.totalorder %s19, 0
    %p130 = por %p128, %p129
    %s132 = sadd.s32 %s131, 1
    %p135 = scmp.eq.s32.totalorder %s13, 7
    %p136 = scmp.ne.s32.totalorder %s131, %s133
    %p137 = scmp.eq.s32.totalorder %s13, 0
    %p138 = por %p136, %p137
    %p139 = scmp.ne.s32.totalorder %s131, %s133
    %p140 = scmp.eq.s32.totalorder %s18, 7
    %p141 = por %p139, %p140
    %p142 = scmp.ne.s32.totalorder %s133, %s134
    %p143 = scmp.eq.s32.totalorder %s18, 0
    %p144 = por %p142, %p143
    %p145 = scmp.ne.s32.totalorder %s133, %s134
    %p146 = scmp.eq.s32.totalorder %s19, 7
    %p147 = por %p145, %p146
    %p149 = scmp.ne.s32.totalorder %s134, %s148
    %p150 = scmp.eq.s32.totalorder %s19, 0
    %p151 = por %p149, %p150
    %s153 = sadd.s32 %s152, 1
    %p156 = scmp.eq.s32.totalorder %s13, 7
    %p157 = scmp.ne.s32.totalorder %s152, %s154
    %p158 = scmp.eq.s32.totalorder %s13, 0
    %p159 = por %p157, %p158
    %p160 = scmp.ne.s32.totalorder %s152, %s154
    %p161 = scmp.eq.s32.totalorder %s18, 7
    %p162 = por %p160, %p161
    %p163 = scmp.ne.s32.totalorder %s154, %s155
    %p164 = scmp.eq.s32.totalorder %s18, 0
    %p165 = por %p163, %p164
    %p166 = scmp.ne.s32.totalorder %s154, %s155
    %p167 = scmp.eq.s32.totalorder %s19, 7
    %p168 = por %p166, %p167
    %p170 = scmp.ne.s32.totalorder %s155, %s169
    %p171 = scmp.eq.s32.totalorder %s19, 0
    %p172 = por %p170, %p171
    %s173 = ssub.s32 %s13, %s20
    %p174 = scmp.eq.s32.totalorder %s173, 0
    %s176 = sadd.s32 %s175, 1
    %s177 = scalar_select %p174, %s175, %s176
    %p180 = pneg %p174
    %p181 = scmp.eq.s32.totalorder %s13, 7
    %p182 = por %p180, %p181
    %p183 = scmp.ne.s32.totalorder %s175, %s178
    %p184 = scmp.eq.s32.totalorder %s13, 0
    %p185 = por %p183, %p184
    %p186 = scmp.ne.s32.totalorder %s175, %s178
    %p187 = scmp.eq.s32.totalorder %s18, 7
    %p188 = por %p186, %p187
    %p189 = scmp.ne.s32.totalorder %s178, %s179
    %p190 = scmp.eq.s32.totalorder %s18, 0
    %p191 = por %p189, %p190
    %p192 = scmp.ne.s32.totalorder %s178, %s179
    %p193 = scmp.eq.s32.totalorder %s19, 7
    %p194 = por %p192, %p193
    %p196 = scmp.ne.s32.totalorder %s179, %s195
    %p197 = scmp.eq.s32.totalorder %s19, 0
    %p198 = por %p196, %p197
    %p199 = scmp.le.s32.totalorder 1, %s13
    %p200 = scmp.lt.s32.totalorder %s13, 9
    %p201 = pnand %p199, %p200
    %p202 = pneg %p201
    // Predicated region
    $region9: #{dws_conv_block.1} parent=5 // pred_check
      _
    $region10: #{dws_conv_block.1} parent=5 // pred_check_branch
      %204 = sbr.rel (%p201) target = $region12
    $region11: #{dws_conv_block.1} parent=5 // pred_region
      %s205 = ssub.s32 %s13, 1
      // Predicated region
      $region13: #{dws_conv_block.1} parent=11 // pred_check
        %p206 = pneg %p60
      $region14: #{dws_conv_block.1} parent=11 // pred_check_branch
        %208 = sbr.rel (%p206) target = $region16
      $region15: #{dws_conv_block.1} parent=11 // pred_region
        _
      $region16: #{dws_conv_block.1} parent=11 // pred_fallthru
        _
      // Predicated region
      $region17: #{dws_conv_block.1} parent=11 // pred_check
        %p209 = pneg %p81
      $region18: #{dws_conv_block.1} parent=11 // pred_check_branch
        %211 = sbr.rel (%p209) target = $region20
      $region19: #{dws_conv_block.1} parent=11 // pred_region
        _
      $region20: #{dws_conv_block.1} parent=11 // pred_fallthru
        _
      // Predicated region
      $region21: #{dws_conv_block.1} parent=11 // pred_check
        %p212 = pneg %p102
      $region22: #{dws_conv_block.1} parent=11 // pred_check_branch
        %214 = sbr.rel (%p212) target = $region24
      $region23: #{dws_conv_block.1} parent=11 // pred_region
        _
      $region24: #{dws_conv_block.1} parent=11 // pred_fallthru
        _
      // Predicated region
      $region25: #{dws_conv_block.1} parent=11 // pred_check
        %p215 = pneg %p123
      $region26: #{dws_conv_block.1} parent=11 // pred_check_branch
        %217 = sbr.rel (%p215) target = $region28
      $region27: #{dws_conv_block.1} parent=11 // pred_region
        _
      $region28: #{dws_conv_block.1} parent=11 // pred_fallthru
        _
      // Predicated region
      $region29: #{dws_conv_block.1} parent=11 // pred_check
        %p218 = pneg %p144
      $region30: #{dws_conv_block.1} parent=11 // pred_check_branch
        %220 = sbr.rel (%p218) target = $region32
      $region31: #{dws_conv_block.1} parent=11 // pred_region
        _
      $region32: #{dws_conv_block.1} parent=11 // pred_fallthru
        _
      // Predicated region
      $region33: #{dws_conv_block.1} parent=11 // pred_check
        %p221 = pneg %p165
      $region34: #{dws_conv_block.1} parent=11 // pred_check_branch
        %223 = sbr.rel (%p221) target = $region36
      $region35: #{dws_conv_block.1} parent=11 // pred_region
        _
      $region36: #{dws_conv_block.1} parent=11 // pred_fallthru
        _
    $region12: #{dws_conv_block.1} parent=5 // pred_fallthru
      _
    %p224 = scmp.lt.s32.totalorder %s13, 8
    // Predicated region
    $region37: #{dws_conv_block.1} parent=5 // pred_check
      %p225 = pneg %p224
    $region38: #{dws_conv_block.1} parent=5 // pred_check_branch
      %227 = sbr.rel (%p225) target = $region40
    $region39: #{dws_conv_block.1} parent=5 // pred_region
      // Predicated region
      $region41: #{dws_conv_block.1} parent=39 // pred_check
        %p228 = pneg %p33
      $region42: #{dws_conv_block.1} parent=39 // pred_check_branch
        %230 = sbr.rel (%p228) target = $region44
      $region43: #{dws_conv_block.1} parent=39 // pred_region
        %p231 = scmp.lt.s32.totalorder %s13, 7
        %s232 = scalar_select %p231, %s13, 7
        %s233 = smul.addr %s232, 18
        %s234 = smul.addr %s233, 4
        %s235 = scalar_lea.vmem %s0, %s234
      $region44: #{dws_conv_block.1} parent=39 // pred_fallthru
        _
    $region40: #{dws_conv_block.1} parent=5 // pred_fallthru
      _
    %p236 = scmp.le.s32.totalorder 1, %s13
    %p237 = scmp.lt.s32.totalorder %s13, 9
    %p238 = pnand %p236, %p237
    %p239 = pneg %p238
    // Predicated region
    $region45: #{dws_conv_block.1} parent=5 // pred_check
      _
    $region46: #{dws_conv_block.1} parent=5 // pred_check_branch
      %241 = sbr.rel (%p238) target = $region48
    $region47: #{dws_conv_block.1} parent=5 // pred_region
      %s242 = ssub.s32 %s13, 1
      %p243 = scmp.lt.s32.totalorder %s18, 7
      %s244 = scalar_select %p243, %s18, 7
      %s245 = smul.addr %s244, 18
      %s246 = smul.addr %s245, 4
      %s247 = scalar_lea.vmem %s0, %s246
      %p248 = pneg %p39
      %p249 = pneg %p36
      %p250 = pneg %p60
      %p251 = pneg %p57
      %p252 = pneg %p81
      %p253 = pneg %p78
      %p254 = pneg %p102
      %p255 = pneg %p99
      %p256 = pneg %p123
      %p257 = pneg %p120
      %p258 = pneg %p144
      %p259 = pneg %p141
      %p260 = pneg %p165
      %p261 = pneg %p162
      %p262 = pneg %p191
      %p263 = pneg %p188
      %p264 = scmp.lt.s32.totalorder %s18, 7
      %s265 = scalar_select %p264, %s18, 7
      %s266 = smul.addr %s265, 8
      %s267 = smul.addr %s266, 8
      %s268 = scalar_lea.vmem %s7, %s267
      %p269 = scmp.lt.s32.totalorder %s18, 7
      %s270 = scalar_select %p269, %s18, 7
      %s271 = smul.addr %s270, 18
      %s272 = smul.addr %s271, 4
      %s273 = scalar_lea.vmem %s0, %s272
      %p274 = scmp.lt.s32.totalorder %s18, 7
      %s275 = scalar_select %p274, %s18, 7
      %s276 = smul.addr %s275, 8
      %s277 = smul.addr %s276, 8
      %s278 = scalar_lea.vmem %s7, %s277
      %v280 = vld [vmem:[%s1] sm:$0xff]
      %v281 = vld [vmem:[%s1 + $0x8] sm:$0x1]
      %v282 = vld [vmem:[%s273] sm:$0xf]
      %v283 = vld [vmem:[%s273 + $0x4] sm:$0xf]
      %v284 = vld [vmem:[%s273 + $0x8] sm:$0x1]
      %v285 = vld [vmem:[%s273 + $0xc] sm:$0xf]
      %v286 = vld [vmem:[%s273 + $0x10] sm:$0xf]
      %v287 = vld [vmem:[%s273 + $0x14] sm:$0x1]
      %v288 = vld [vmem:[%s273 + $0x18] sm:$0xf]
      %v289 = vld [vmem:[%s273 + $0x1c] sm:$0xf]
      %v290 = vld [vmem:[%s273 + $0x20] sm:$0x1]
      %v291 = vld [vmem:[%s273 + $0x24] sm:$0xf]
      %v292 = vld [vmem:[%s273 + $0x28] sm:$0xf]
      %v293 = vld [vmem:[%s273 + $0x2c] sm:$0x1]
      %v294 = vld [vmem:[%s273 + $0x30] sm:$0xf]
      %v295 = vld [vmem:[%s273 + $0x34] sm:$0xf]
      %v296 = vld [vmem:[%s273 + $0x38] sm:$0x1]
      %v297 = vld [vmem:[%s273 + $0x3c] sm:$0xf]
      %v298 = vld [vmem:[%s273 + $0x40] sm:$0xf]
      %v299 = vld [vmem:[%s273 + $0x44] sm:$0x1]
      %v300 = vunpack.c.l.bf16 %v282
      %v301 = vunpack.c.l.bf16 %v283
      %v302 = vunpack.c.l.bf16 %v284
      %v303 = vunpack.c.l.bf16 %v285
      %v304 = vunpack.c.l.bf16 %v286
      %v305 = vunpack.c.l.bf16 %v287
      %v306 = vunpack.c.l.bf16 %v288
      %v307 = vunpack.c.l.bf16 %v289
      %v308 = vunpack.c.l.bf16 %v290
      %v309 = vunpack.c.l.bf16 %v291
      %v310 = vunpack.c.l.bf16 %v292
      %v311 = vunpack.c.l.bf16 %v293
      %v312 = vunpack.c.l.bf16 %v294
      %v313 = vunpack.c.l.bf16 %v295
      %v314 = vunpack.c.l.bf16 %v296
      %v315 = vunpack.c.l.bf16 %v297
      %v316 = vunpack.c.l.bf16 %v298
      %v317 = vunpack.c.l.bf16 %v299
      %v318 = vlaneseq
      %v319 = vshrl.u32 %v318, 7
      %v320 = vsub.s32 0, %v319
      %v321 = vrot.slane %v280, %v320
      %v322 = vmul.f32 %v300, %v321
      %v323 = vmul.f32 %v301, %v321
      %v324 = vmul.f32 %v303, %v321
      %v325 = vmul.f32 %v304, %v321
      %v326 = vmul.f32 %v306, %v321
      %v327 = vmul.f32 %v307, %v321
      %v328 = vmul.f32 %v309, %v321
      %v329 = vmul.f32 %v310, %v321
      %v330 = vadd.f32 %v322, 0.0
      %v331 = vadd.f32 %v323, 0.0
      %v332 = vadd.f32 %v324, 0.0
      %v333 = vadd.f32 %v325, 0.0
      %v334 = vadd.f32 %v326, 0.0
      %v335 = vadd.f32 %v327, 0.0
      %v336 = vadd.f32 %v328, 0.0
      %v337 = vadd.f32 %v329, 0.0
      %v338 = vlaneseq
      %v339 = vshrl.u32 %v338, 7
      %v340 = vsub.s32 1, %v339
      %v341 = vrot.slane %v280, %v340
      %v342 = vmul.f32 %v300, %v341
      %v343 = vmul.f32 %v301, %v341
      %v344 = vmul.f32 %v302, %v341
      %v345 = vmul.f32 %v303, %v341
      %v346 = vmul.f32 %v304, %v341
      %v347 = vmul.f32 %v305, %v341
      %v348 = vmul.f32 %v306, %v341
      %v349 = vmul.f32 %v307, %v341
      %v350 = vmul.f32 %v308, %v341
      %v351 = vmul.f32 %v309, %v341
      %v352 = vmul.f32 %v310, %v341
      %v353 = vmul.f32 %v311, %v341
      %vm366 = vcmask 1046528
      %v367 = vrot.slane %v342, 1
      %v368 = vrot.slane %v343, 1
      %v369 = vsel %vm366, %v367, %v368
      %v370 = vrot.slane %v344, 1
      %v371 = vsel %vm366, %v368, %v370
      %v372 = vrot.slane %v345, 1
      %v373 = vrot.slane %v346, 1
      %v374 = vsel %vm366, %v372, %v373
      %v375 = vrot.slane %v347, 1
      %v376 = vsel %vm366, %v373, %v375
      %v377 = vrot.slane %v348, 1
      %v378 = vrot.slane %v349, 1
      %v379 = vsel %vm366, %v377, %v378
      %v380 = vrot.slane %v350, 1
      %v381 = vsel %vm366, %v378, %v380
      %v382 = vrot.slane %v351, 1
      %v383 = vrot.slane %v352, 1
      %v384 = vsel %vm366, %v382, %v383
      %v385 = vrot.slane %v353, 1
      %v386 = vsel %vm366, %v383, %v385
      %v395 = vadd.f32 %v330, %v369
      %v396 = vadd.f32 %v331, %v371
      %v397 = vadd.f32 %v332, %v374
      %v398 = vadd.f32 %v333, %v376
      %v399 = vadd.f32 %v334, %v379
      %v400 = vadd.f32 %v335, %v381
      %v401 = vadd.f32 %v336, %v384
      %v402 = vadd.f32 %v337, %v386
      %v403 = vlaneseq
      %v404 = vshrl.u32 %v403, 7
      %v405 = vsub.s32 2, %v404
      %v406 = vrot.slane %v280, %v405
      %v407 = vmul.f32 %v300, %v406
      %v408 = vmul.f32 %v301, %v406
      %v409 = vmul.f32 %v302, %v406
      %v410 = vmul.f32 %v303, %v406
      %v411 = vmul.f32 %v304, %v406
      %v412 = vmul.f32 %v305, %v406
      %v413 = vmul.f32 %v306, %v406
      %v414 = vmul.f32 %v307, %v406
      %v415 = vmul.f32 %v308, %v406
      %v416 = vmul.f32 %v309, %v406
      %v417 = vmul.f32 %v310, %v406
      %v418 = vmul.f32 %v311, %v406
      %vm431 = vcmask 1045504
      %v432 = vrot.slane %v407, 2
      %v433 = vrot.slane %v408, 2
      %v434 = vsel %vm431, %v432, %v433
      %v435 = vrot.slane %v409, 2
      %v436 = vsel %vm431, %v433, %v435
      %v437 = vrot.slane %v410, 2
      %v438 = vrot.slane %v411, 2
      %v439 = vsel %vm431, %v437, %v438
      %v440 = vrot.slane %v412, 2
      %v441 = vsel %vm431, %v438, %v440
      %v442 = vrot.slane %v413, 2
      %v443 = vrot.slane %v414, 2
      %v444 = vsel %vm431, %v442, %v443
      %v445 = vrot.slane %v415, 2
      %v446 = vsel %vm431, %v443, %v445
      %v447 = vrot.slane %v416, 2
      %v448 = vrot.slane %v417, 2
      %v449 = vsel %vm431, %v447, %v448
      %v450 = vrot.slane %v418, 2
      %v451 = vsel %vm431, %v448, %v450
      %v460 = vadd.f32 %v395, %v434
      %v461 = vadd.f32 %v396, %v436
      %v462 = vadd.f32 %v397, %v439
      %v463 = vadd.f32 %v398, %v441
      %v464 = vadd.f32 %v399, %v444
      %v465 = vadd.f32 %v400, %v446
      %v466 = vadd.f32 %v401, %v449
      %v467 = vadd.f32 %v402, %v451
      %v468 = vlaneseq
      %v469 = vshrl.u32 %v468, 7
      %v470 = vsub.s32 3, %v469
      %v471 = vrot.slane %v280, %v470
      %v472 = vmul.f32 %v303, %v471
      %v473 = vmul.f32 %v304, %v471
      %v474 = vmul.f32 %v306, %v471
      %v475 = vmul.f32 %v307, %v471
      %v476 = vmul.f32 %v309, %v471
      %v477 = vmul.f32 %v310, %v471
      %v478 = vmul.f32 %v312, %v471
      %v479 = vmul.f32 %v313, %v471
      %v480 = vadd.f32 %v460, %v472
      %v481 = vadd.f32 %v461, %v473
      %v482 = vadd.f32 %v462, %v474
      %v483 = vadd.f32 %v463, %v475
      %v484 = vadd.f32 %v464, %v476
      %v485 = vadd.f32 %v465, %v477
      %v486 = vadd.f32 %v466, %v478
      %v487 = vadd.f32 %v467, %v479
      %v488 = vlaneseq
      %v489 = vshrl.u32 %v488, 7
      %v490 = vsub.s32 4, %v489
      %v491 = vrot.slane %v280, %v490
      %v492 = vmul.f32 %v303, %v491
      %v493 = vmul.f32 %v304, %v491
      %v494 = vmul.f32 %v305, %v491
      %v495 = vmul.f32 %v306, %v491
      %v496 = vmul.f32 %v307, %v491
      %v497 = vmul.f32 %v308, %v491
      %v498 = vmul.f32 %v309, %v491
      %v499 = vmul.f32 %v310, %v491
      %v500 = vmul.f32 %v311, %v491
      %v501 = vmul.f32 %v312, %v491
      %v502 = vmul.f32 %v313, %v491
      %v503 = vmul.f32 %v314, %v491
      %v516 = vrot.slane %v492, 1
      %v517 = vrot.slane %v493, 1
      %v518 = vsel %vm366, %v516, %v517
      %v519 = vrot.slane %v494, 1
      %v520 = vsel %vm366, %v517, %v519
      %v521 = vrot.slane %v495, 1
      %v522 = vrot.slane %v496, 1
      %v523 = vsel %vm366, %v521, %v522
      %v524 = vrot.slane %v497, 1
      %v525 = vsel %vm366, %v522, %v524
      %v526 = vrot.slane %v498, 1
      %v527 = vrot.slane %v499, 1
      %v528 = vsel %vm366, %v526, %v527
      %v529 = vrot.slane %v500, 1
      %v530 = vsel %vm366, %v527, %v529
      %v531 = vrot.slane %v501, 1
      %v532 = vrot.slane %v502, 1
      %v533 = vsel %vm366, %v531, %v532
      %v534 = vrot.slane %v503, 1
      %v535 = vsel %vm366, %v532, %v534
      %v544 = vadd.f32 %v480, %v518
      %v545 = vadd.f32 %v481, %v520
      %v546 = vadd.f32 %v482, %v523
      %v547 = vadd.f32 %v483, %v525
      %v548 = vadd.f32 %v484, %v528
      %v549 = vadd.f32 %v485, %v530
      %v550 = vadd.f32 %v486, %v533
      %v551 = vadd.f32 %v487, %v535
      %v552 = vlaneseq
      %v553 = vshrl.u32 %v552, 7
      %v554 = vsub.s32 5, %v553
      %v555 = vrot.slane %v280, %v554
      %v556 = vmul.f32 %v303, %v555
      %v557 = vmul.f32 %v304, %v555
      %v558 = vmul.f32 %v305, %v555
      %v559 = vmul.f32 %v306, %v555
      %v560 = vmul.f32 %v307, %v555
      %v561 = vmul.f32 %v308, %v555
      %v562 = vmul.f32 %v309, %v555
      %v563 = vmul.f32 %v310, %v555
      %v564 = vmul.f32 %v311, %v555
      %v565 = vmul.f32 %v312, %v555
      %v566 = vmul.f32 %v313, %v555
      %v567 = vmul.f32 %v314, %v555
      %v580 = vrot.slane %v556, 2
      %v581 = vrot.slane %v557, 2
      %v582 = vsel %vm431, %v580, %v581
      %v583 = vrot.slane %v558, 2
      %v584 = vsel %vm431, %v581, %v583
      %v585 = vrot.slane %v559, 2
      %v586 = vrot.slane %v560, 2
      %v587 = vsel %vm431, %v585, %v586
      %v588 = vrot.slane %v561, 2
      %v589 = vsel %vm431, %v586, %v588
      %v590 = vrot.slane %v562, 2
      %v591 = vrot.slane %v563, 2
      %v592 = vsel %vm431, %v590, %v591
      %v593 = vrot.slane %v564, 2
      %v594 = vsel %vm431, %v591, %v593
      %v595 = vrot.slane %v565, 2
      %v596 = vrot.slane %v566, 2
      %v597 = vsel %vm431, %v595, %v596
      %v598 = vrot.slane %v567, 2
      %v599 = vsel %vm431, %v596, %v598
      %v608 = vadd.f32 %v544, %v582
      %v609 = vadd.f32 %v545, %v584
      %v610 = vadd.f32 %v546, %v587
      %v611 = vadd.f32 %v547, %v589
      %v612 = vadd.f32 %v548, %v592
      %v613 = vadd.f32 %v549, %v594
      %v614 = vadd.f32 %v550, %v597
      %v615 = vadd.f32 %v551, %v599
      %v616 = vlaneseq
      %v617 = vshrl.u32 %v616, 7
      %v618 = vsub.s32 6, %v617
      %v619 = vrot.slane %v280, %v618
      %v620 = vmul.f32 %v306, %v619
      %v621 = vmul.f32 %v307, %v619
      %v622 = vmul.f32 %v309, %v619
      %v623 = vmul.f32 %v310, %v619
      %v624 = vmul.f32 %v312, %v619
      %v625 = vmul.f32 %v313, %v619
      %v626 = vmul.f32 %v315, %v619
      %v627 = vmul.f32 %v316, %v619
      %v628 = vadd.f32 %v608, %v620
      %v629 = vadd.f32 %v609, %v621
      %v630 = vadd.f32 %v610, %v622
      %v631 = vadd.f32 %v611, %v623
      %v632 = vadd.f32 %v612, %v624
      %v633 = vadd.f32 %v613, %v625
      %v634 = vadd.f32 %v614, %v626
      %v635 = vadd.f32 %v615, %v627
      %v636 = vlaneseq
      %v637 = vshrl.u32 %v636, 7
      %v638 = vsub.s32 7, %v637
      %v639 = vrot.slane %v280, %v638
      %v640 = vmul.f32 %v306, %v639
      %v641 = vmul.f32 %v307, %v639
      %v642 = vmul.f32 %v308, %v639
      %v643 = vmul.f32 %v309, %v639
      %v644 = vmul.f32 %v310, %v639
      %v645 = vmul.f32 %v311, %v639
      %v646 = vmul.f32 %v312, %v639
      %v647 = vmul.f32 %v313, %v639
      %v648 = vmul.f32 %v314, %v639
      %v649 = vmul.f32 %v315, %v639
      %v650 = vmul.f32 %v316, %v639
      %v651 = vmul.f32 %v317, %v639
      %v664 = vrot.slane %v640, 1
      %v665 = vrot.slane %v641, 1
      %v666 = vsel %vm366, %v664, %v665
      %v667 = vrot.slane %v642, 1
      %v668 = vsel %vm366, %v665, %v667
      %v669 = vrot.slane %v643, 1
      %v670 = vrot.slane %v644, 1
      %v671 = vsel %vm366, %v669, %v670
      %v672 = vrot.slane %v645, 1
      %v673 = vsel %vm366, %v670, %v672
      %v674 = vrot.slane %v646, 1
      %v675 = vrot.slane %v647, 1
      %v676 = vsel %vm366, %v674, %v675
      %v677 = vrot.slane %v648, 1
      %v678 = vsel %vm366, %v675, %v677
      %v679 = vrot.slane %v649, 1
      %v680 = vrot.slane %v650, 1
      %v681 = vsel %vm366, %v679, %v680
      %v682 = vrot.slane %v651, 1
      %v683 = vsel %vm366, %v680, %v682
      %v692 = vadd.f32 %v628, %v666
      %v693 = vadd.f32 %v629, %v668
      %v694 = vadd.f32 %v630, %v671
      %v695 = vadd.f32 %v631, %v673
      %v696 = vadd.f32 %v632, %v676
      %v697 = vadd.f32 %v633, %v678
      %v698 = vadd.f32 %v634, %v681
      %v699 = vadd.f32 %v635, %v683
      %v700 = vlaneseq
      %v701 = vshrl.u32 %v700, 7
      %v702 = vsub.s32 0, %v701
      %v703 = vrot.slane %v281, %v702
      %v704 = vmul.f32 %v306, %v703
      %v705 = vmul.f32 %v307, %v703
      %v706 = vmul.f32 %v308, %v703
      %v707 = vmul.f32 %v309, %v703
      %v708 = vmul.f32 %v310, %v703
      %v709 = vmul.f32 %v311, %v703
      %v710 = vmul.f32 %v312, %v703
      %v711 = vmul.f32 %v313, %v703
      %v712 = vmul.f32 %v314, %v703
      %v713 = vmul.f32 %v315, %v703
      %v714 = vmul.f32 %v316, %v703
      %v715 = vmul.f32 %v317, %v703
      %v728 = vrot.slane %v704, 2
      %v729 = vrot.slane %v705, 2
      %v730 = vsel %vm431, %v728, %v729
      %v731 = vrot.slane %v706, 2
      %v732 = vsel %vm431, %v729, %v731
      %v733 = vrot.slane %v707, 2
      %v734 = vrot.slane %v708, 2
      %v735 = vsel %vm431, %v733, %v734
      %v736 = vrot.slane %v709, 2
      %v737 = vsel %vm431, %v734, %v736
      %v738 = vrot.slane %v710, 2
      %v739 = vrot.slane %v711, 2
      %v740 = vsel %vm431, %v738, %v739
      %v741 = vrot.slane %v712, 2
      %v742 = vsel %vm431, %v739, %v741
      %v743 = vrot.slane %v713, 2
      %v744 = vrot.slane %v714, 2
      %v745 = vsel %vm431, %v743, %v744
      %v746 = vrot.slane %v715, 2
      %v747 = vsel %vm431, %v744, %v746
      %v756 = vadd.f32 %v692, %v730
      %v757 = vadd.f32 %v693, %v732
      %v758 = vadd.f32 %v694, %v735
      %v759 = vadd.f32 %v695, %v737
      %v760 = vadd.f32 %v696, %v740
      %v761 = vadd.f32 %v697, %v742
      %v762 = vadd.f32 %v698, %v745
      %v763 = vadd.f32 %v699, %v747
      %v764 = vld [vmem:[%s2] sm:$0x1]
      %v766 = vlaneseq
      %v767 = vshrl.u32 %v766, 7
      %v768 = vsub.s32 0, %v767
      %v769 = vrot.slane %v764, %v768
      %v771 = vmul.f32 %v756, %v769
      %v772 = vmul.f32 %v757, %v769
      %v773 = vmul.f32 %v758, %v769
      %v774 = vmul.f32 %v759, %v769
      %v775 = vmul.f32 %v760, %v769
      %v776 = vmul.f32 %v761, %v769
      %v777 = vmul.f32 %v762, %v769
      %v778 = vmul.f32 %v763, %v769
      %v779 = vld [vmem:[%s3] sm:$0x1]
      %v781 = vlaneseq
      %v782 = vshrl.u32 %v781, 7
      %v783 = vsub.s32 0, %v782
      %v784 = vrot.slane %v779, %v783
      %v786 = vadd.f32 %v771, %v784
      %v787 = vadd.f32 %v772, %v784
      %v788 = vadd.f32 %v773, %v784
      %v789 = vadd.f32 %v774, %v784
      %v790 = vadd.f32 %v775, %v784
      %v791 = vadd.f32 %v776, %v784
      %v792 = vadd.f32 %v777, %v784
      %v793 = vadd.f32 %v778, %v784
      %v794 = vmax.f32 %v786, 0.0
      %v795 = vmax.f32 %v787, 0.0
      %v796 = vmax.f32 %v788, 0.0
      %v797 = vmax.f32 %v789, 0.0
      %v798 = vmax.f32 %v790, 0.0
      %v799 = vmax.f32 %v791, 0.0
      %v800 = vmax.f32 %v792, 0.0
      %v801 = vmax.f32 %v793, 0.0
      %v802 = vpack.c.bf16 %v795, %v794
      %v803 = vpack.c.bf16 %v797, %v796
      %v804 = vpack.c.bf16 %v799, %v798
      %v805 = vpack.c.bf16 %v801, %v800
      %v806 = vld [vmem:[%s4] sm:$0xf]
      %v807 = vld [vmem:[%s4 + $0x4] sm:$0xf]
      %v808 = vld [vmem:[%s4 + $0x8] sm:$0xf]
      %v809 = vld [vmem:[%s4 + $0xc] sm:$0xf]
      %v810 = vld [vmem:[%s4 + $0x10] sm:$0xf]
      %v811 = vld [vmem:[%s4 + $0x14] sm:$0xf]
      %v812 = vld [vmem:[%s4 + $0x18] sm:$0xf]
      %v813 = vld [vmem:[%s4 + $0x1c] sm:$0xf]
      %v814 = vld [vmem:[%s4 + $0x20] sm:$0xf]
      %v815 = vld [vmem:[%s4 + $0x24] sm:$0xf]
      %v816 = vld [vmem:[%s4 + $0x28] sm:$0xf]
      %v817 = vld [vmem:[%s4 + $0x2c] sm:$0xf]
      %v818 = vld [vmem:[%s4 + $0x30] sm:$0xf]
      %v819 = vld [vmem:[%s4 + $0x34] sm:$0xf]
      %v820 = vld [vmem:[%s4 + $0x38] sm:$0xf]
      %v821 = vld [vmem:[%s4 + $0x3c] sm:$0xf]
      %v838 = vunpack.c.l.b16 %v806
      %v839 = vunpack.c.l.b16 %v807
      %v840 = vunpack.c.l.b16 %v808
      %v841 = vunpack.c.l.b16 %v809
      %v842 = vunpack.c.l.b16 %v810
      %v843 = vunpack.c.l.b16 %v811
      %v844 = vunpack.c.l.b16 %v812
      %v845 = vunpack.c.l.b16 %v813
      %v846 = vunpack.c.l.b16 %v814
      %v847 = vunpack.c.l.b16 %v815
      %v848 = vunpack.c.l.b16 %v816
      %v849 = vunpack.c.l.b16 %v817
      %v850 = vunpack.c.l.b16 %v818
      %v851 = vunpack.c.l.b16 %v819
      %v852 = vunpack.c.l.b16 %v820
      %v853 = vunpack.c.l.b16 %v821
      %v854 = vpack.c.b16 %v839, %v838
      %v855 = vpack.c.b16 %v841, %v840
      %v856 = vpack.c.b16 %v843, %v842
      %v857 = vpack.c.b16 %v845, %v844
      %v858 = vpack.c.b16 %v847, %v846
      %v859 = vpack.c.b16 %v849, %v848
      %v860 = vpack.c.b16 %v851, %v850
      %v861 = vpack.c.b16 %v853, %v852
      %870 = vmatprep.subr.bf16.mxu0 0
      %871 = vmatpush1.bf16.msra.mxu0 %v854
      %872 = vmatprep.subr.bf16.mxu0 0
      %873 = vmatpush1.bf16.msra.mxu0 %v855
      %874 = vmatprep.subr.bf16.mxu0 0
      %875 = vmatpush1.bf16.msra.mxu0 %v856
      %876 = vmatprep.subr.bf16.mxu0 0
      %877 = vmatpush1.bf16.msra.mxu0 %v857
      %878 = vmatprep.subr.bf16.mxu0 0
      %879 = vmatpush1.bf16.msra.mxu0 %v858
      %880 = vmatprep.subr.bf16.mxu0 0
      %881 = vmatpush1.bf16.msra.mxu0 %v859
      %882 = vmatprep.subr.bf16.mxu0 0
      %883 = vmatpush1.bf16.msra.mxu0 %v860
      %884 = vmatprep.subr.bf16.mxu0 0
      %885 = vmatpush1.bf16.msra.mxu0 %v861
      %886 = vmatprep.subr.bf16.mxu0 0
      %887 = vmatpush1.bf16.msra.mxu0 0
      %888 = vmatprep.subr.bf16.mxu0 0
      %889 = vmatpush1.bf16.msra.mxu0 0
      %890 = vmatprep.subr.bf16.mxu0 0
      %891 = vmatpush1.bf16.msra.mxu0 0
      %892 = vmatprep.subr.bf16.mxu0 0
      %893 = vmatpush1.bf16.msra.mxu0 0
      %894 = vmatprep.subr.bf16.mxu0 0
      %895 = vmatpush1.bf16.msra.mxu0 0
      %896 = vmatprep.subr.bf16.mxu0 0
      %897 = vmatpush1.bf16.msra.mxu0 0
      %898 = vmatprep.subr.bf16.mxu0 0
      %899 = vmatpush1.bf16.msra.mxu0 0
      %900 = vmatprep.subr.bf16.mxu0 0
      %901 = vmatpush1.bf16.msra.mxu0 0
      %902 = vmatprep.mubr.bf16.mxu0 0
      %903 = vmatmul.mubr.bf16.gmra.mrb[0].mxu0 %v802
      %v904 = vpop.f32.mrb[0].mxu0
      %v905 = vadd.f32 0.0, %v904
      %v906 = vpop.f32.mrb[0].mxu0
      %v907 = vpop.f32.mrb[0].mxu0
      %v908 = vadd.f32 0.0, %v907
      %v909 = vpop.f32.mrb[0].mxu0
      %910 = vmatprep.mubr.bf16.mxu0 0
      %911 = vmatmul.mubr.bf16.gmra.mrb[0].mxu0 %v803
      %v912 = vpop.f32.mrb[0].mxu0
      %v913 = vadd.f32 0.0, %v912
      %v914 = vpop.f32.mrb[0].mxu0
      %v915 = vpop.f32.mrb[0].mxu0
      %v916 = vadd.f32 0.0, %v915
      %v917 = vpop.f32.mrb[0].mxu0
      %918 = vmatprep.mubr.bf16.mxu0 0
      %919 = vmatmul.mubr.bf16.gmra.mrb[0].mxu0 %v804
      %v920 = vpop.f32.mrb[0].mxu0
      %v921 = vadd.f32 0.0, %v920
      %v922 = vpop.f32.mrb[0].mxu0
      %v923 = vpop.f32.mrb[0].mxu0
      %v924 = vadd.f32 0.0, %v923
      %v925 = vpop.f32.mrb[0].mxu0
      %926 = vmatprep.mubr.bf16.mxu0 0
      %927 = vmatmul.mubr.bf16.gmra.mrb[0].mxu0 %v805
      %v928 = vpop.f32.mrb[0].mxu0
      %v929 = vadd.f32 0.0, %v928
      %v930 = vpop.f32.mrb[0].mxu0
      %v931 = vpop.f32.mrb[0].mxu0
      %v932 = vadd.f32 0.0, %v931
      %v933 = vpop.f32.mrb[0].mxu0
      %934 = vdwg.mxu0
      %v935 = vld [vmem:[%s5] sm:$0x1]
      %v937 = vlaneseq
      %v938 = vshrl.u32 %v937, 7
      %v939 = vsub.s32 0, %v938
      %v940 = vrot.slane %v935, %v939
      %v942 = vmul.f32 %v905, %v940
      %v943 = vmul.f32 %v908, %v940
      %v944 = vmul.f32 %v913, %v940
      %v945 = vmul.f32 %v916, %v940
      %v946 = vmul.f32 %v921, %v940
      %v947 = vmul.f32 %v924, %v940
      %v948 = vmul.f32 %v929, %v940
      %v949 = vmul.f32 %v932, %v940
      %v950 = vld [vmem:[%s6] sm:$0x1]
      %v952 = vlaneseq
      %v953 = vshrl.u32 %v952, 7
      %v954 = vsub.s32 0, %v953
      %v955 = vrot.slane %v950, %v954
      %v957 = vadd.f32 %v942, %v955
      %v958 = vadd.f32 %v943, %v955
      %v959 = vadd.f32 %v944, %v955
      %v960 = vadd.f32 %v945, %v955
      %v961 = vadd.f32 %v946, %v955
      %v962 = vadd.f32 %v947, %v955
      %v963 = vadd.f32 %v948, %v955
      %v964 = vadd.f32 %v949, %v955
      %v965 = vmax.f32 %v957, 0.0
      %v966 = vmax.f32 %v958, 0.0
      %v967 = vmax.f32 %v959, 0.0
      %v968 = vmax.f32 %v960, 0.0
      %v969 = vmax.f32 %v961, 0.0
      %v970 = vmax.f32 %v962, 0.0
      %v971 = vmax.f32 %v963, 0.0
      %v972 = vmax.f32 %v964, 0.0
      %973 = vst [vmem:[%s278] sm:$0xff] %v965
      %974 = vst [vmem:[%s278 + $0x8] sm:$0xff] %v966
      %975 = vst [vmem:[%s278 + $0x10] sm:$0xff] %v967
      %976 = vst [vmem:[%s278 + $0x18] sm:$0xff] %v968
      %977 = vst [vmem:[%s278 + $0x20] sm:$0xff] %v969
      %978 = vst [vmem:[%s278 + $0x28] sm:$0xff] %v970
      %979 = vst [vmem:[%s278 + $0x30] sm:$0xff] %v971
      %980 = vst [vmem:[%s278 + $0x38] sm:$0xff] %v972
      %p981 = scmp.lt.s32.totalorder %s18, 7
      %s982 = scalar_select %p981, %s18, 7
      %s983 = smul.addr %s982, 8
      %s984 = smul.addr %s983, 8
      %s985 = scalar_lea.vmem %s7, %s984
      // Predicated region
      $region49: #{dws_conv_block.1} parent=47 // pred_check
        %p986 = pneg %p188
      $region50: #{dws_conv_block.1} parent=47 // pred_check_branch
        %988 = sbr.rel (%p986) target = $region52
      $region51: #{dws_conv_block.1} parent=47 // pred_region
        _
      $region52: #{dws_conv_block.1} parent=47 // pred_fallthru
        _
    $region48: #{dws_conv_block.1} parent=5 // pred_fallthru
      _
    %p989 = scmp.le.s32.totalorder 2, %s13
    // Predicated region
    $region53: #{dws_conv_block.1} parent=5 // pred_check
      %p990 = pneg %p989
    $region54: #{dws_conv_block.1} parent=5 // pred_check_branch
      %992 = sbr.rel (%p990) target = $region56
    $region55: #{dws_conv_block.1} parent=5 // pred_region
      %s993 = ssub.s32 %s13, 2
      // Predicated region
      $region57: #{dws_conv_block.1} parent=55 // pred_check
        %p994 = pneg %p194
      $region58: #{dws_conv_block.1} parent=55 // pred_check_branch
        %996 = sbr.rel (%p994) target = $region60
      $region59: #{dws_conv_block.1} parent=55 // pred_region
        %p997 = scmp.lt.s32.totalorder %s19, 7
        %s998 = scalar_select %p997, %s19, 7
        %s999 = smul.addr %s998, 8
        %s1000 = smul.addr %s999, 8
        %s1001 = scalar_lea.vmem %s7, %s1000
      $region60: #{dws_conv_block.1} parent=55 // pred_fallthru
        _
    $region56: #{dws_conv_block.1} parent=5 // pred_fallthru
      _
  $region6: #{dws_conv_block.1} parent=0 // loop_footer
    %s17 = sadd.s32 1, %s13
  $region7: #{dws_conv_block.1} parent=0 // loop_footer_branch
    %12 = sbr.rel target = $region3
  $region8: #{dws_conv_block.1} parent=0 // loop_exit
    _

</llo_original>
